<compile_context>
chip_gen: v6e
topology: v6e:2x2x1
jax: 0.10.0
libtpu: 0.0.40
codegen_flags: <defaults>
</compile_context>

<pallas_src>
import functools
import math

import jax
import jax.numpy as jnp
from jax import lax
from jax.experimental import pallas as pl
from jax.experimental.pallas import tpu as pltpu


# ------------------------------ tiled linear --------------------------------
# y = x @ w.T (+ b), w in PyTorch (Dout, Din) layout.

def _linear_kernel(x_ref, w_ref, o_ref, acc_ref):
    @pl.when(pl.program_id(2) == 0)
    def _init():
        acc_ref[...] = jnp.zeros_like(acc_ref)

    # Contract last dims of x (tm, tk) and w (tn, tk) -> (tm, tn); MXU consumes
    # the transposed operand natively, no w_ref[...].T.
    acc_ref[...] += lax.dot_general(
        x_ref[...], w_ref[...],
        dimension_numbers=(((1,), (1,)), ((), ())),
        preferred_element_type=jnp.float32,
    )

    @pl.when(pl.program_id(2) == pl.num_programs(2) - 1)
    def _finalize():
        o_ref[...] = acc_ref[...]


def _linear_bias_kernel(x_ref, w_ref, b_ref, o_ref, acc_ref):
    @pl.when(pl.program_id(2) == 0)
    def _init():
        acc_ref[...] = jnp.zeros_like(acc_ref)

    acc_ref[...] += lax.dot_general(
        x_ref[...], w_ref[...],
        dimension_numbers=(((1,), (1,)), ((), ())),
        preferred_element_type=jnp.float32,
    )

    @pl.when(pl.program_id(2) == pl.num_programs(2) - 1)
    def _finalize():
        o_ref[...] = acc_ref[...] + b_ref[...]


def _pick_tile(dim, target):
    """Use `target` if it tiles the dim evenly, else fall back to the full dim."""
    return target if (dim % target == 0) else dim


def linear_pallas(x, w, b=None, *, tm=256, tn=256, tk=256):
    """x: (M, Din), w: (Dout, Din), b: (Dout,) or None -> (M, Dout) f32."""
    M, Din = x.shape
    Dout = w.shape[0]
    tm = _pick_tile(M, tm)
    tn = _pick_tile(Dout, tn)
    tk = _pick_tile(Din, tk)
    grid = (M // tm, Dout // tn, Din // tk)

    # 256-ish tiles keep the double-buffered working set at a few MiB, which
    # fits v7x's 64 MiB VMEM as well as v5e/v6e; explicit limit leaves headroom.
    compiler_params = pltpu.CompilerParams(
        dimension_semantics=("parallel", "parallel", "arbitrary"),
        vmem_limit_bytes=32 * 1024 * 1024,
    )

    out_shape = jax.ShapeDtypeStruct((M, Dout), jnp.float32)
    x_spec = pl.BlockSpec((tm, tk), lambda i, j, k: (i, k))
    w_spec = pl.BlockSpec((tn, tk), lambda i, j, k: (j, k))
    o_spec = pl.BlockSpec((tm, tn), lambda i, j, k: (i, j))
    scratch = [pltpu.VMEM((tm, tn), jnp.float32)]

    if b is None:
        return pl.pallas_call(
            _linear_kernel,
            out_shape=out_shape,
            grid=grid,
            in_specs=[x_spec, w_spec],
            out_specs=o_spec,
            scratch_shapes=scratch,
            compiler_params=compiler_params,
        )(x, w)

    b2 = b.reshape(1, Dout).astype(jnp.float32)
    b_spec = pl.BlockSpec((1, tn), lambda i, j, k: (0, j))
    return pl.pallas_call(
        _linear_bias_kernel,
        out_shape=out_shape,
        grid=grid,
        in_specs=[x_spec, w_spec, b_spec],
        out_specs=o_spec,
        scratch_shapes=scratch,
        compiler_params=compiler_params,
    )(x, w, b2)


# ----------------------------- attention kernel -----------------------------

def _mha_attn_kernel(q_ref, k_ref, v_ref, o_ref, *, scale):
    # One batch element per grid step; all H heads batched in one einsum so the
    # per-step work amortizes the ~0.35us grid overhead vs. one head per step.
    q = q_ref[0] * scale          # fold scale into q: S*Dh mults instead of S*T
    k = k_ref[0]                  # (H, T, Dh)
    v = v_ref[0]                  # (H, T, Dh)
    # Batched contraction on last dims -- no in-kernel transpose of k.
    s = jnp.einsum("hsd,htd->hst", q, k, preferred_element_type=jnp.float32)
    m = jnp.max(s, axis=-1, keepdims=True)
    p = jnp.exp(s - m)
    denom = jnp.sum(p, axis=-1, keepdims=True)
    y = jnp.einsum("hst,htd->hsd", p, v, preferred_element_type=jnp.float32)
    # Normalize after the PV matmul (S*Dh mults instead of S*T).
    # TODO(synk): in production use pl.reciprocal(denom, approx=True) (EUP slot);
    # exact division kept here to preserve 1e-4 parity with the f32 reference.
    o_ref[0] = y * (1.0 / denom)
    # TODO(synk): at production Dh, also batch several batch elements per step
    # and emit a lane-dense (multiple-of-128 last dim) output slab.


def attention_pallas(qh, kh, vh, scale):
    """qh: (N, H, S, Dh), kh/vh: (N, H, T, Dh) -> (N, H, S, Dh) f32."""
    N, H, S, Dh = qh.shape
    T = kh.shape[2]
    kernel = functools.partial(_mha_attn_kernel, scale=float(scale))
    return pl.pallas_call(
        kernel,
        out_shape=jax.ShapeDtypeStruct((N, H, S, Dh), jnp.float32),
        grid=(N,),
        in_specs=[
            pl.BlockSpec((1, H, S, Dh), lambda n: (n, 0, 0, 0)),
            pl.BlockSpec((1, H, T, Dh), lambda n: (n, 0, 0, 0)),
            pl.BlockSpec((1, H, T, Dh), lambda n: (n, 0, 0, 0)),
        ],
        out_specs=pl.BlockSpec((1, H, S, Dh), lambda n: (n, 0, 0, 0)),
        compiler_params=pltpu.CompilerParams(
            dimension_semantics=("parallel",),
            vmem_limit_bytes=32 * 1024 * 1024,
        ),
    )(qh, kh, vh)


# ------------------------------ full forward --------------------------------

def multi_head_attention_forward(params, query, key, value):
    """Reproduces MultiHeadAttentionLayer.forward (attn_mask=None, eval dropout)."""
    N, S, D = query.shape
    T = value.shape[1]
    H = params["num_heads"]
    Dh = D // H

    # q/k/v projections (Linear, no bias).
    # TODO(synk): query/key/value are distinct tensors (cross-attention), so the
    # single fused (3D, D) QKV projection only applies in the self-attention case.
    q = linear_pallas(query.reshape(N * S, D), params["wq"]).reshape(N, S, D)
    k = linear_pallas(key.reshape(N * T, D), params["wk"]).reshape(N, T, D)
    v = linear_pallas(value.reshape(N * T, D), params["wv"]).reshape(N, T, D)

    # torch.stack(torch.chunk(x, H, 2), dim=1): (N, L, D) -> (N, H, L, Dh)
    qh = jnp.transpose(q.reshape(N, S, H, Dh), (0, 2, 1, 3))
    kh = jnp.transpose(k.reshape(N, T, H, Dh), (0, 2, 1, 3))
    vh = jnp.transpose(v.reshape(N, T, H, Dh), (0, 2, 1, 3))

    # Static python float -> compile-time constant inside the kernel (no traced
    # closure capture).
    scale = 1.0 / math.sqrt(D / H)
    y = attention_pallas(qh, kh, vh, scale)            # (N, H, S, Dh)

    # Reproduce the module's literal y.reshape(N, S, -1) (no head transpose).
    y = y.reshape(N, S, H * Dh)

    # head_proj (Linear with bias).
    out = linear_pallas(y.reshape(N * S, D), params["wo"], params["bo"])
    return out.reshape(N, S, D)


# ----------------------------- pure-JAX reference ---------------------------

def reference_forward(params, query, key, value):
    N, S, D = query.shape
    T = value.shape[1]
    H = params["num_heads"]
    Dh = D // H
    q = query @ params["wq"].T
    k = key @ params["wk"].T
    v = value @ params["wv"].T
    qh = jnp.transpose(q.reshape(N, S, H, Dh), (0, 2, 1, 3))
    kh = jnp.transpose(k.reshape(N, T, H, Dh), (0, 2, 1, 3))
    vh = jnp.transpose(v.reshape(N, T, H, Dh), (0, 2, 1, 3))
    scores = jnp.einsum("nhsd,nhtd->nhst", qh, kh) / jnp.sqrt(jnp.float32(D / H))
    p = jax.nn.softmax(scores, axis=-1)
    y = jnp.einsum("nhst,nhtd->nhsd", p, vh)
    y = y.reshape(N, S, H * Dh)
    return y @ params["wo"].T + params["bo"]


# ---------------------------------- main -------------------------------------

if __name__ == "__main__":
    N, S, T = 2, 8, 8
    D, H = 32, 4

    root = jax.random.PRNGKey(0)
    kq, kk, kv, ko, kb, kx1, kx2, kx3 = jax.random.split(root, 8)
    bound = 1.0 / math.sqrt(D)
    params = {
        "num_heads": H,
        "wq": jax.random.uniform(kq, (D, D), jnp.float32, -bound, bound),
        "wk": jax.random.uniform(kk, (D, D), jnp.float32, -bound, bound),
        "wv": jax.random.uniform(kv, (D, D), jnp.float32, -bound, bound),
        "wo": jax.random.uniform(ko, (D, D), jnp.float32, -bound, bound),
        "bo": jax.random.uniform(kb, (D,), jnp.float32, -bound, bound),
    }

    query = jax.random.normal(kx1, (N, S, D), jnp.float32)
    key = jax.random.normal(kx2, (N, T, D), jnp.float32)
    value = jax.random.normal(kx3, (N, T, D), jnp.float32)

    out = multi_head_attention_forward(params, query, key, value)
    out = jax.block_until_ready(out)

    ref = reference_forward(params, query, key, value)
    assert out.shape == (N, S, D)
    assert jnp.allclose(out, ref, atol=1e-4, rtol=1e-4), "mismatch vs JAX reference"

    print("KERNEL_OK")
</pallas_src>

<mosaic_0001>
module attributes {stable_mosaic.version = 11 : i64} {
  func.func @_linear_kernel(%arg0: i32, %arg1: i32, %arg2: i32, %arg3: memref<16x32xf32, #tpu.memory_space<vmem>>, %arg4: memref<32x32xf32, #tpu.memory_space<vmem>>, %arg5: memref<16x32xf32, #tpu.memory_space<vmem>>, %arg6: memref<16x32xf32, #tpu.memory_space<vmem>>) attributes {dimension_semantics = [#tpu.dimension_semantics<parallel>, #tpu.dimension_semantics<parallel>, #tpu.dimension_semantics<arbitrary>], iteration_bounds = array<i64: 1, 1, 1>, scalar_prefetch = 0 : i64, scratch_operands = 1 : i64, tpu.core_type = #tpu.core_type<tc>, window_params = [{transform_indices = @transform_0, window_bounds = array<i64: 16, 32>}, {transform_indices = @transform_1, window_bounds = array<i64: 32, 32>}, {transform_indices = @transform_2, window_bounds = array<i64: 16, 32>}]} {
    %c0_i32 = arith.constant 0 : i32
    %0 = arith.cmpi eq, %arg2, %c0_i32 : i32
    %1 = arith.extui %0 : i1 to i32
    %c0_i32_0 = arith.constant 0 : i32
    %2 = arith.cmpi ne, %1, %c0_i32_0 : i32
    scf.if %2 {
      %cst_10 = arith.constant 0.000000e+00 : f32
      %12 = vector.broadcast %cst_10 : f32 to vector<16x32xf32>
      %c0_11 = arith.constant 0 : index
      %c0_12 = arith.constant 0 : index
      %13 = vector.load %arg6[%c0_11, %c0_12] : memref<16x32xf32, #tpu.memory_space<vmem>>, vector<16x32xf32>
      tpu.vector_store %arg6[%c0_11, %c0_12], %12 {strides = array<i32>} : memref<16x32xf32, #tpu.memory_space<vmem>>, vector<16x32xf32>,
    } else {
    }
    %c0 = arith.constant 0 : index
    %c0_1 = arith.constant 0 : index
    %3 = vector.load %arg6[%c0, %c0_1] : memref<16x32xf32, #tpu.memory_space<vmem>>, vector<16x32xf32>
    %c0_2 = arith.constant 0 : index
    %c0_3 = arith.constant 0 : index
    %4 = vector.load %arg3[%c0_2, %c0_3] : memref<16x32xf32, #tpu.memory_space<vmem>>, vector<16x32xf32>
    %c0_4 = arith.constant 0 : index
    %c0_5 = arith.constant 0 : index
    %5 = vector.load %arg4[%c0_4, %c0_5] : memref<32x32xf32, #tpu.memory_space<vmem>>, vector<32x32xf32>
    %cst = arith.constant dense<0.000000e+00> : vector<16x32xf32>
    %6 = tpu.matmul %4, %5, %cst {dimension_numbers = #tpu.dot_dimension_numbers<[1], [1], [0], [0], [0, 0, 1, 0], [], []>} : vector<16x32xf32>, vector<32x32xf32>, vector<16x32xf32> -> vector<16x32xf32>
    %7 = arith.addf %3, %6 : vector<16x32xf32>
    %c0_6 = arith.constant 0 : index
    %c0_7 = arith.constant 0 : index
    %8 = vector.load %arg6[%c0_6, %c0_7] : memref<16x32xf32, #tpu.memory_space<vmem>>, vector<16x32xf32>
    tpu.vector_store %arg6[%c0_6, %c0_7], %7 {strides = array<i32>} : memref<16x32xf32, #tpu.memory_space<vmem>>, vector<16x32xf32>,
    %c0_i32_8 = arith.constant 0 : i32
    %9 = arith.cmpi eq, %arg2, %c0_i32_8 : i32
    %10 = arith.extui %9 : i1 to i32
    %c0_i32_9 = arith.constant 0 : i32
    %11 = arith.cmpi ne, %10, %c0_i32_9 : i32
    scf.if %11 {
      %c0_10 = arith.constant 0 : index
      %c0_11 = arith.constant 0 : index
      %12 = vector.load %arg6[%c0_10, %c0_11] : memref<16x32xf32, #tpu.memory_space<vmem>>, vector<16x32xf32>
      %c0_12 = arith.constant 0 : index
      %c0_13 = arith.constant 0 : index
      %13 = vector.load %arg5[%c0_12, %c0_13] : memref<16x32xf32, #tpu.memory_space<vmem>>, vector<16x32xf32>
      tpu.vector_store %arg5[%c0_12, %c0_13], %12 {strides = array<i32>} : memref<16x32xf32, #tpu.memory_space<vmem>>, vector<16x32xf32>,
    } else {
    }
    return
  }
  func.func @transform_0(%arg0: i32, %arg1: i32, %arg2: i32) -> (i32, i32) {
    %c0_i32 = arith.constant 0 : i32
    return %arg0, %arg2 : i32, i32
  }
  func.func @transform_1(%arg0: i32, %arg1: i32, %arg2: i32) -> (i32, i32) {
    %c0_i32 = arith.constant 0 : i32
    return %arg1, %arg2 : i32, i32
  }
  func.func @transform_2(%arg0: i32, %arg1: i32, %arg2: i32) -> (i32, i32) {
    %c0_i32 = arith.constant 0 : i32
    return %arg0, %arg1 : i32, i32
  }
}

</mosaic_0001>

<llo_original>
// kernel: tpu_custom_call.1
$region0: #{tpu_custom_call.1}
  #allocation0 [shape = 'u32[]', space=smem, size = 0x4, offset = 0x4, fixed_abs, tag = 'smem constant byte address 0x4 - core index']
  #allocation1 [shape = 'u32[144,128]{1,0:T(1,128)}', space=vmem, size = 0x12000, scoped, tag = 'internal scratch']
  #allocation2 [shape = 'f32[16,32]{1,0:T(8,128)}', space=vmem, size = 0x2000, scoped, tag = 'scratch operand']
  %s0 = inlined_call_operand.hbm [shape: f32[16,32], index: 0, kind: input, shape index: {}]
  %s1 = inlined_call_operand.hbm [shape: f32[32,32], index: 1, kind: input, shape index: {}]
  %s2 = inlined_call_operand.hbm [shape: f32[16,32], index: 2, kind: output, shape index: {}]
  %s3 = sld [smem:[#allocation0]]
  $region34: #{tpu_custom_call.1} parent=0
    _
  %s5 = ssub.s32 1, %s3
  %s6 = scalar_select 0, %s5, %s3
  $region1: #{tpu_custom_call.1} parent=0
    #allocation3 [shape = 'u8[8192]{0}', space=vmem, size = 0x2000, scoped, tag = 'input window, operand 0, single buffered']
    #allocation4 [shape = 's32[1]{0}', space=sflag, size = 0x4, scoped, tag = 'scoped memory for tpu_custom_call.1']
    #allocation5 [shape = 's32[1]{0}', space=sflag, size = 0x4, scoped, tag = 'scoped memory for tpu_custom_call.1']
    #allocation6 [shape = 'u8[16384]{0}', space=vmem, size = 0x4000, scoped, tag = 'input window, operand 1, single buffered']
    #allocation7 [shape = 's32[1]{0}', space=sflag, size = 0x4, scoped, tag = 'scoped memory for tpu_custom_call.1']
    #allocation8 [shape = 'u8[8192]{0}', space=vmem, size = 0x2000, scoped, tag = 'output window, operand 0, single buffered']
    %7 = vsyncpa [#allocation4], 0
    %8 = vsyncpa [#allocation7], 0
    %9 = vsyncpa [#allocation5], 0
    // Predicated region
    $region2: #{tpu_custom_call.1} parent=1 // pred_check
      _
    $region3: #{tpu_custom_call.1} parent=1 // pred_check_branch
      %11 = sbr.rel (0) target = $region5
    $region4: #{tpu_custom_call.1} parent=1 // pred_region
      %s13 = ssub.s32 256, 256
      %14 = vsyncadd [#allocation4], %s13
      %s15 = sshll.u32 [#allocation3], 4
      %s16 = int_to_ptr.vmem [resolvable:$true] %s15
      %21 = dma.hbm_to_vmem [thread:$0]  %s0, 256, %s16, [#allocation4], 128, 128, 8
    $region5: #{tpu_custom_call.1} parent=1 // pred_fallthru
      _
    // Predicated region
    $region6: #{tpu_custom_call.1} parent=1 // pred_check
      _
    $region7: #{tpu_custom_call.1} parent=1 // pred_check_branch
      %23 = sbr.rel (0) target = $region9
    $region8: #{tpu_custom_call.1} parent=1 // pred_region
      %s25 = ssub.s32 512, 512
      %26 = vsyncadd [#allocation7], %s25
      %s27 = sshll.u32 [#allocation6], 4
      %s28 = int_to_ptr.vmem [resolvable:$true] %s27
      %33 = dma.hbm_to_vmem [thread:$0]  %s1, 512, %s28, [#allocation7], 128, 128, 8
    $region9: #{tpu_custom_call.1} parent=1 // pred_fallthru
      _
    // Predicated region
    $region10: #{tpu_custom_call.1} parent=1 // pred_check
      _
    $region11: #{tpu_custom_call.1} parent=1 // pred_check_branch
      %35 = sbr.rel (0) target = $region13
    $region12: #{tpu_custom_call.1} parent=1 // pred_region
      %36 = dma.done [#allocation4], 256
    $region13: #{tpu_custom_call.1} parent=1 // pred_fallthru
      _
    // Predicated region
    $region14: #{tpu_custom_call.1} parent=1 // pred_check
      _
    $region15: #{tpu_custom_call.1} parent=1 // pred_check_branch
      %38 = sbr.rel (0) target = $region17
    $region16: #{tpu_custom_call.1} parent=1 // pred_region
      %39 = dma.done [#allocation7], 512
    $region17: #{tpu_custom_call.1} parent=1 // pred_fallthru
      _
    %p40 = scmp.eq.s32.totalorder 0, 0
    // Predicated region
    $region18: #{tpu_custom_call.1} parent=1 // pred_check
      %p41 = pneg %p40
    $region19: #{tpu_custom_call.1} parent=1 // pred_check_branch
      %43 = sbr.rel (%p41) target = $region21
    $region20: #{tpu_custom_call.1} parent=1 // pred_region
      %vm44 = vcmask 261120
      %45 = vst.msk [vmem:[#allocation2] sm:$0xff] %vm44, 0.0
      %46 = vst.msk [vmem:[#allocation2 + $0x8] sm:$0xff] %vm44, 0.0
    $region21: #{tpu_custom_call.1} parent=1 // pred_fallthru
      _
    %v47 = vld [vmem:[#allocation2] sm:$0xff]
    %v48 = vld [vmem:[#allocation2 + $0x8] sm:$0xff]
    %v49 = vld [vmem:[#allocation3] sm:$0xff]
    %v50 = vld [vmem:[#allocation3 + $0x8] sm:$0xff]
    %v51 = vld [vmem:[#allocation6] sm:$0xff]
    %v52 = vld [vmem:[#allocation6 + $0x8] sm:$0xff]
    %v53 = vld [vmem:[#allocation6 + $0x10] sm:$0xff]
    %v54 = vld [vmem:[#allocation6 + $0x18] sm:$0xff]
    %vm55 = vcmask 261120
    %v57 = vsel %vm55, %v49, 0
    %v60 = vsel %vm55, %v50, 0
    %v63 = vsel %vm55, %v51, 0
    %v66 = vsel %vm55, %v52, 0
    %v69 = vsel %vm55, %v53, 0
    %v72 = vsel %vm55, %v54, 0
    %74 = vmatprep.subr.mxu0 0.0
    %75 = vmatpush1.xpose.msra.mxu0 0.0
    %76 = vmatprep.subr.mxu0 0.0
    %77 = vmatpush1.xpose.msra.mxu0 0.0
    %78 = vmatprep.subr.mxu0 0.0
    %79 = vmatpush1.xpose.msra.mxu0 0.0
    %80 = vmatprep.subr.mxu0 0.0
    %81 = vmatpush1.xpose.msra.mxu0 0.0
    %82 = vmatprep.subr.mxu0 0.0
    %83 = vmatpush1.xpose.msra.mxu0 0.0
    %84 = vmatprep.subr.mxu0 0.0
    %85 = vmatpush1.xpose.msra.mxu0 0.0
    %86 = vmatprep.subr.mxu0 0.0
    %87 = vmatpush1.xpose.msra.mxu0 0.0
    %88 = vmatprep.subr.mxu0 0.0
    %89 = vmatpush1.xpose.msra.mxu0 0.0
    %90 = vmatprep.subr.mxu0 0.0
    %91 = vmatpush1.xpose.msra.mxu0 0.0
    %92 = vmatprep.subr.mxu0 0.0
    %93 = vmatpush1.xpose.msra.mxu0 0.0
    %94 = vmatprep.subr.mxu0 0.0
    %95 = vmatpush1.xpose.msra.mxu0 0.0
    %96 = vmatprep.subr.mxu0 0.0
    %97 = vmatpush1.xpose.msra.mxu0 0.0
    %98 = vmatprep.subr.mxu0 0.0
    %99 = vmatpush1.xpose.msra.mxu0 %v72
    %100 = vmatprep.subr.mxu0 0.0
    %101 = vmatpush1.xpose.msra.mxu0 %v69
    %102 = vmatprep.subr.mxu0 0.0
    %103 = vmatpush1.xpose.msra.mxu0 %v66
    %104 = vmatprep.subr.mxu0 0.0
    %105 = vmatpush1.xpose.msra.mxu0 %v63
    %106 = vmatprep.subr.mxu0 0.0
    %107 = vmatpush2.xpose.msra.mxu0 0.0
    %108 = vmatprep.subr.mxu0 0.0
    %109 = vmatpush2.xpose.msra.mxu0 0.0
    %110 = vmatprep.subr.mxu0 0.0
    %111 = vmatpush2.xpose.msra.mxu0 0.0
    %112 = vmatprep.subr.mxu0 0.0
    %113 = vmatpush2.xpose.msra.mxu0 0.0
    %114 = vmatprep.subr.mxu0 0.0
    %115 = vmatpush2.xpose.msra.mxu0 0.0
    %116 = vmatprep.subr.mxu0 0.0
    %117 = vmatpush2.xpose.msra.mxu0 0.0
    %118 = vmatprep.subr.mxu0 0.0
    %119 = vmatpush2.xpose.msra.mxu0 0.0
    %120 = vmatprep.subr.mxu0 0.0
    %121 = vmatpush2.xpose.msra.mxu0 0.0
    %122 = vmatprep.subr.mxu0 0.0
    %123 = vmatpush2.xpose.msra.mxu0 0.0
    %124 = vmatprep.subr.mxu0 0.0
    %125 = vmatpush2.xpose.msra.mxu0 0.0
    %126 = vmatprep.subr.mxu0 0.0
    %127 = vmatpush2.xpose.msra.mxu0 0.0
    %128 = vmatprep.subr.mxu0 0.0
    %129 = vmatpush2.xpose.msra.mxu0 0.0
    %130 = vmatprep.subr.mxu0 0.0
    %131 = vmatpush2.xpose.msra.mxu0 0.0
    %132 = vmatprep.subr.mxu0 0.0
    %133 = vmatpush2.xpose.msra.mxu0 0.0
    %134 = vmatprep.subr.mxu0 0.0
    %135 = vmatpush2.xpose.msra.mxu0 0.0
    %136 = vmatprep.subr.mxu0 0.0
    %137 = vmatpush2.xpose.msra.mxu0 0.0
    %138 = vmatprep.mubr.f32.mxu0 0.0
    %139 = vmatmul.mubr.f32.gmra.mxu0 %v57
    %v140 = vpop.f32.mrf.mxu0
    %v141 = vadd.f32 0.0, %v140
    %v142 = vpop.f32.mrf.mxu0
    %143 = vmatprep.mubr.f32.mxu0 0.0
    %144 = vmatmul.mubr.f32.gmra.mxu0 %v60
    %v145 = vpop.f32.mrf.mxu0
    %v146 = vadd.f32 0.0, %v145
    %v147 = vpop.f32.mrf.mxu0
    %148 = vdwg.mxu0
    %v149 = vadd.f32 %v47, %v141
    %v150 = vadd.f32 %v48, %v146
    %151 = vst.msk [vmem:[#allocation2] sm:$0xff] %vm55, %v149
    %152 = vst.msk [vmem:[#allocation2 + $0x8] sm:$0xff] %vm55, %v150
    // Predicated region
    $region22: #{tpu_custom_call.1} parent=1 // pred_check
      %p153 = pneg %p40
    $region23: #{tpu_custom_call.1} parent=1 // pred_check_branch
      %155 = sbr.rel (%p153) target = $region25
    $region24: #{tpu_custom_call.1} parent=1 // pred_region
      %v156 = vld [vmem:[#allocation2] sm:$0xff]
      %v157 = vld [vmem:[#allocation2 + $0x8] sm:$0xff]
      %158 = vst.msk [vmem:[#allocation8] sm:$0xff] %vm55, %v156
      %159 = vst.msk [vmem:[#allocation8 + $0x8] sm:$0xff] %vm55, %v157
    $region25: #{tpu_custom_call.1} parent=1 // pred_fallthru
      _
    // Predicated region
    $region26: #{tpu_custom_call.1} parent=1 // pred_check
      _
    $region27: #{tpu_custom_call.1} parent=1 // pred_check_branch
      %161 = sbr.rel (0) target = $region29
    $region28: #{tpu_custom_call.1} parent=1 // pred_region
      %s163 = ssub.s32 256, 256
      %164 = vsyncadd [#allocation5], %s163
      %s165 = sshll.u32 [#allocation8], 4
      %s166 = int_to_ptr.vmem [resolvable:$true] %s165
      %171 = dma.vmem_to_hbm [thread:$0]  %s166, 256, %s2, [#allocation5], 128, 128, 8
    $region29: #{tpu_custom_call.1} parent=1 // pred_fallthru
      _
    // Predicated region
    $region30: #{tpu_custom_call.1} parent=1 // pred_check
      _
    $region31: #{tpu_custom_call.1} parent=1 // pred_check_branch
      %173 = sbr.rel (0) target = $region33
    $region32: #{tpu_custom_call.1} parent=1 // pred_region
      %174 = dma.done [#allocation5], 256
    $region33: #{tpu_custom_call.1} parent=1 // pred_fallthru
      _
    %175 = vsyncpa [#allocation4], 1
    %176 = vsyncpa [#allocation7], 1
    %177 = vsyncpa [#allocation5], 1

</llo_original>
